<compile_context>
chip_gen: v7x
topology: tpu7x:2x2x1
jax: 0.10.0
libtpu: 0.0.40
codegen_flags: <defaults>
</compile_context>

<pallas_src>
import jax
import jax.numpy as jnp
import numpy as np
from jax import lax
from jax.experimental import pallas as pl
from jax.experimental.pallas import tpu as pltpu


def _round_up(v, m):
    return (v + m - 1) // m * m


def _rnn_block_kernel(x_ref, wih_ref, whh_ref, b_ref, wfc_ref, bfc_ref,
                      out_ref, h_ref, hs_ref):
    """One (batch-block, time-block) step of the fused RNN + FC forward.

    Shapes (all (8,128)-tile aligned):
      x_ref   : (T_blk, B_blk, I_pad)   input slab for this time block
      wih_ref : (I_pad, H_pad)          W_ih^T   (grid-invariant, resident)
      whh_ref : (H_pad, H_pad)          W_hh^T   (grid-invariant, resident)
      b_ref   : (1, H_pad)   f32        b_ih + b_hh
      wfc_ref : (H_pad, O_pad)          W_fc^T   (grid-invariant, resident)
      bfc_ref : (1, O_pad)   f32        b_fc
      out_ref : (T_blk, B_blk, O_pad)   lane-dense output slab
      h_ref   : (B_blk, H_pad) f32      hidden state carried across time blocks
      hs_ref  : (T_blk, B_blk, H_pad)   gates -> hidden-state slab (MXU dtype)
    """
    # Reset the carried hidden state at the first time block of each batch blk.
    @pl.when(pl.program_id(1) == 0)
    def _init():
        h_ref[...] = jnp.zeros_like(h_ref)

    t_blk, b_blk, i_pad = x_ref.shape
    h_pad = whh_ref.shape[0]
    o_pad = out_ref.shape[-1]

    whh = whh_ref[...]
    mxu_dtype = whh.dtype

    # --- Hoisted input projection: ONE (T_blk*B_blk, I)x(I, H) MXU matmul ---
    gates = jnp.dot(x_ref[...].reshape(t_blk * b_blk, i_pad), wih_ref[...],
                    preferred_element_type=jnp.float32) + b_ref[...]
    hs_ref[...] = gates.reshape(t_blk, b_blk, h_pad).astype(hs_ref.dtype)

    # --- Serial recurrence: only (B_blk, H)x(H, H) + tanh on the chain -------
    # Leading-axis ref indexing keeps every access tile aligned; the hidden
    # carry stays f32 (bf16, if requested, is used only as an MXU operand).
    def step(t, h):
        g_t = hs_ref[t].astype(jnp.float32)
        h = jnp.tanh(g_t + jnp.dot(h.astype(mxu_dtype), whh,
                                   preferred_element_type=jnp.float32))
        hs_ref[t] = h.astype(hs_ref.dtype)
        return h

    h_ref[...] = lax.fori_loop(0, t_blk, step, h_ref[...],
                               unroll=min(t_blk, 8))

    # --- FC head over the whole block's hidden slab; single dense store -----
    out = jnp.dot(hs_ref[...].reshape(t_blk * b_blk, h_pad), wfc_ref[...],
                  preferred_element_type=jnp.float32) + bfc_ref[...]
    out_ref[...] = out.reshape(t_blk, b_blk, o_pad).astype(out_ref.dtype)


def rnn_forward(x, params, *, t_blk=None, b_blk=None, mxu_dtype=jnp.float32):
    """x: (batch, seq, input_size) f32 -> (batch, seq, output_size) f32.

    mxu_dtype: dtype of the matmul operands (jnp.float32 or jnp.bfloat16);
    accumulation and the hidden carry are always f32.
    """
    B, S, I = x.shape
    W_ih, W_hh, b_ih, b_hh, W_fc, b_fc = params
    H = W_ih.shape[0]
    O = W_fc.shape[0]

    # (8, 128) tile alignment: batch -> sublanes, features -> lanes.
    B_pad = _round_up(B, 8)
    I_pad = _round_up(I, 128)
    H_pad = _round_up(H, 128)
    O_pad = _round_up(O, 128)

    if t_blk is None:
        t_blk = min(S, 128)                  # time block; keeps VMEM bounded
    S_pad = _round_up(S, t_blk)
    n_tb = S_pad // t_blk

    if b_blk is None:
        b_blk = B_pad                        # one batch block at small B
    b_blk = _round_up(b_blk, 8)
    B_pad = _round_up(B_pad, b_blk)
    n_bb = B_pad // b_blk                    # "parallel" axis -> 2nd TC on v7x

    # Seq-major, padded input (S_pad, B_pad, I_pad).  Zero padding is inert:
    # padded weight rows/cols are zero, so padded feature columns stay zero
    # and padded batch rows / trailing timesteps never feed real outputs.
    x_sm = jnp.transpose(x, (1, 0, 2))
    x_p = jnp.zeros((S_pad, B_pad, I_pad), mxu_dtype)
    x_p = x_p.at[:S, :B, :I].set(x_sm.astype(mxu_dtype))

    wih_t = jnp.zeros((I_pad, H_pad), mxu_dtype).at[:I, :H].set(
        W_ih.T.astype(mxu_dtype))
    whh_t = jnp.zeros((H_pad, H_pad), mxu_dtype).at[:H, :H].set(
        W_hh.T.astype(mxu_dtype))
    wfc_t = jnp.zeros((H_pad, O_pad), mxu_dtype).at[:H, :O].set(
        W_fc.T.astype(mxu_dtype))
    bias = jnp.zeros((1, H_pad), jnp.float32).at[0, :H].set(b_ih + b_hh)
    bfc = jnp.zeros((1, O_pad), jnp.float32).at[0, :O].set(b_fc)

    itemsize = jnp.dtype(mxu_dtype).itemsize
    cost = pl.CostEstimate(
        flops=2 * S_pad * B_pad * (I_pad * H_pad + H_pad * H_pad
                                   + H_pad * O_pad),
        transcendentals=S_pad * B_pad * H_pad,
        bytes_accessed=int(S_pad * B_pad * I_pad * itemsize
                           + (I_pad + H_pad + O_pad) * H_pad * itemsize
                           + S_pad * B_pad * O_pad * 4))

    out_p = pl.pallas_call(
        _rnn_block_kernel,
        out_shape=jax.ShapeDtypeStruct((S_pad, B_pad, O_pad), jnp.float32),
        grid_spec=pltpu.PrefetchScalarGridSpec(
            num_scalar_prefetch=0,
            grid=(n_bb, n_tb),               # (parallel batch, serial time)
            in_specs=[
                pl.BlockSpec((t_blk, b_blk, I_pad), lambda b, t: (t, b, 0)),
                pl.BlockSpec((I_pad, H_pad), lambda b, t: (0, 0)),
                pl.BlockSpec((H_pad, H_pad), lambda b, t: (0, 0)),
                pl.BlockSpec((1, H_pad), lambda b, t: (0, 0)),
                pl.BlockSpec((H_pad, O_pad), lambda b, t: (0, 0)),
                pl.BlockSpec((1, O_pad), lambda b, t: (0, 0)),
            ],
            out_specs=pl.BlockSpec((t_blk, b_blk, O_pad),
                                   lambda b, t: (t, b, 0)),
            scratch_shapes=[
                pltpu.VMEM((b_blk, H_pad), jnp.float32),       # hidden carry
                pltpu.VMEM((t_blk, b_blk, H_pad), mxu_dtype),  # gates/h slab
            ],
        ),
        compiler_params=pltpu.CompilerParams(
            dimension_semantics=("parallel", "arbitrary"),
            vmem_limit_bytes=32 * 1024 * 1024),
        cost_estimate=cost,
    )(x_p, wih_t, whh_t, bias, wfc_t, bfc)

    # Un-pad and return to PyTorch's batch_first layout.
    return jnp.transpose(out_p[:S, :B, :O], (1, 0, 2))


def rnn_reference(x, params):
    """Pure-JAX reference matching nn.RNN(batch_first=True) + nn.Linear."""
    W_ih, W_hh, b_ih, b_hh, W_fc, b_fc = params
    B, S, I = x.shape
    H = W_ih.shape[0]

    def step(h, x_t):
        h_new = jnp.tanh(x_t @ W_ih.T + b_ih + h @ W_hh.T + b_hh)
        return h_new, h_new

    h0 = jnp.zeros((B, H), jnp.float32)
    _, hs = lax.scan(step, h0, jnp.transpose(x, (1, 0, 2)))
    out = jnp.transpose(hs, (1, 0, 2))       # (B, S, H)
    return out @ W_fc.T + b_fc


if __name__ == "__main__":
    # Small shapes consistent with the module's forward.
    batch, seq, input_size, hidden_size, output_size = 2, 8, 16, 32, 8

    key = jax.random.PRNGKey(0)
    ks = jax.random.split(key, 7)
    bound = 1.0 / np.sqrt(hidden_size)       # PyTorch default init scale

    W_ih = jax.random.uniform(ks[0], (hidden_size, input_size),
                              jnp.float32, -bound, bound)
    W_hh = jax.random.uniform(ks[1], (hidden_size, hidden_size),
                              jnp.float32, -bound, bound)
    b_ih = jax.random.uniform(ks[2], (hidden_size,), jnp.float32, -bound, bound)
    b_hh = jax.random.uniform(ks[3], (hidden_size,), jnp.float32, -bound, bound)
    W_fc = jax.random.uniform(ks[4], (output_size, hidden_size),
                              jnp.float32, -bound, bound)
    b_fc = jax.random.uniform(ks[5], (output_size,), jnp.float32, -bound, bound)
    params = (W_ih, W_hh, b_ih, b_hh, W_fc, b_fc)

    x = jax.random.normal(ks[6], (batch, seq, input_size), jnp.float32)

    ref = rnn_reference(x, params)

    # f32 path; t_blk=4 -> 2 time blocks, exercising the cross-block
    # hidden-state carry through the persistent VMEM scratch.
    out = rnn_forward(x, params, t_blk=4)
    jax.block_until_ready(out)
    np.testing.assert_allclose(np.asarray(out), np.asarray(ref),
                               rtol=1e-5, atol=1e-5)
    assert out.shape == (batch, seq, output_size)

    # bf16 MXU-operand path (f32 accumulation, f32 hidden carry) for v6e/v7x;
    # validated at bf16-appropriate tolerance.
    out_bf16 = rnn_forward(x, params, t_blk=4, mxu_dtype=jnp.bfloat16)
    jax.block_until_ready(out_bf16)
    np.testing.assert_allclose(np.asarray(out_bf16), np.asarray(ref),
                               rtol=5e-2, atol=5e-2)

    print("KERNEL_OK")
</pallas_src>

<mosaic_0001>
module attributes {stable_mosaic.version = 11 : i64} {
  func.func @_rnn_block_kernel(%arg0: i32, %arg1: i32, %arg2: memref<4x8x128xf32, #tpu.memory_space<vmem>>, %arg3: memref<128x128xf32, #tpu.memory_space<vmem>>, %arg4: memref<128x128xf32, #tpu.memory_space<vmem>>, %arg5: memref<1x128xf32, #tpu.memory_space<vmem>>, %arg6: memref<128x128xf32, #tpu.memory_space<vmem>>, %arg7: memref<1x128xf32, #tpu.memory_space<vmem>>, %arg8: memref<4x8x128xf32, #tpu.memory_space<vmem>>, %arg9: memref<8x128xf32, #tpu.memory_space<vmem>>, %arg10: memref<4x8x128xf32, #tpu.memory_space<vmem>>) attributes {dimension_semantics = [#tpu.dimension_semantics<parallel>, #tpu.dimension_semantics<arbitrary>], iteration_bounds = array<i64: 1, 2>, scalar_prefetch = 0 : i64, scratch_operands = 2 : i64, tpu.core_type = #tpu.core_type<tc>, window_params = [{transform_indices = @transform_0, window_bounds = array<i64: 4, 8, 128>}, {pipeline_mode = #tpu.pipeline_mode<synchronous>, transform_indices = @transform_1, window_bounds = array<i64: 128, 128>}, {pipeline_mode = #tpu.pipeline_mode<synchronous>, transform_indices = @transform_2, window_bounds = array<i64: 128, 128>}, {pipeline_mode = #tpu.pipeline_mode<synchronous>, transform_indices = @transform_3, window_bounds = array<i64: 1, 128>}, {pipeline_mode = #tpu.pipeline_mode<synchronous>, transform_indices = @transform_4, window_bounds = array<i64: 128, 128>}, {pipeline_mode = #tpu.pipeline_mode<synchronous>, transform_indices = @transform_5, window_bounds = array<i64: 1, 128>}, {transform_indices = @transform_6, window_bounds = array<i64: 4, 8, 128>}]} {
    %c0_i32 = arith.constant 0 : i32
    %0 = arith.cmpi eq, %arg1, %c0_i32 : i32
    %1 = arith.extui %0 : i1 to i32
    %c0_i32_0 = arith.constant 0 : i32
    %2 = arith.cmpi ne, %1, %c0_i32_0 : i32
    scf.if %2 {
      %cst_48 = arith.constant 0.000000e+00 : f32
      %64 = vector.broadcast %cst_48 : f32 to vector<8x128xf32>
      %c0_49 = arith.constant 0 : index
      %c0_50 = arith.constant 0 : index
      %65 = vector.load %arg9[%c0_49, %c0_50] : memref<8x128xf32, #tpu.memory_space<vmem>>, vector<8x128xf32>
      tpu.vector_store %arg9[%c0_49, %c0_50], %64 {strides = array<i32>} : memref<8x128xf32, #tpu.memory_space<vmem>>, vector<8x128xf32>,
    } else {
    }
    %c0 = arith.constant 0 : index
    %c0_1 = arith.constant 0 : index
    %3 = vector.load %arg4[%c0, %c0_1] : memref<128x128xf32, #tpu.memory_space<vmem>>, vector<128x128xf32>
    %c0_2 = arith.constant 0 : index
    %c0_3 = arith.constant 0 : index
    %c0_4 = arith.constant 0 : index
    %4 = vector.load %arg2[%c0_2, %c0_3, %c0_4] : memref<4x8x128xf32, #tpu.memory_space<vmem>>, vector<4x8x128xf32>
    %5 = vector.shape_cast %4 : vector<4x8x128xf32> to vector<32x128xf32>
    %c0_5 = arith.constant 0 : index
    %c0_6 = arith.constant 0 : index
    %6 = vector.load %arg3[%c0_5, %c0_6] : memref<128x128xf32, #tpu.memory_space<vmem>>, vector<128x128xf32>
    %cst = arith.constant dense<0.000000e+00> : vector<32x128xf32>
    %7 = tpu.matmul %5, %6, %cst {dimension_numbers = #tpu.dot_dimension_numbers<[1], [0], [0], [1], [0, 0, 1, 1], [], []>} : vector<32x128xf32>, vector<128x128xf32>, vector<32x128xf32> -> vector<32x128xf32>
    %c0_7 = arith.constant 0 : index
    %c0_8 = arith.constant 0 : index
    %8 = vector.load %arg5[%c0_7, %c0_8] : memref<1x128xf32, #tpu.memory_space<vmem>>, vector<1x128xf32>
    %9 = vector.broadcast %8 : vector<1x128xf32> to vector<32x128xf32>
    %10 = arith.addf %7, %9 : vector<32x128xf32>
    %11 = vector.shape_cast %10 : vector<32x128xf32> to vector<4x8x128xf32>
    %c0_9 = arith.constant 0 : index
    %c0_10 = arith.constant 0 : index
    %c0_11 = arith.constant 0 : index
    %12 = vector.load %arg10[%c0_9, %c0_10, %c0_11] : memref<4x8x128xf32, #tpu.memory_space<vmem>>, vector<4x8x128xf32>
    tpu.vector_store %arg10[%c0_9, %c0_10, %c0_11], %11 {strides = array<i32>} : memref<4x8x128xf32, #tpu.memory_space<vmem>>, vector<4x8x128xf32>,
    %c0_12 = arith.constant 0 : index
    %c0_13 = arith.constant 0 : index
    %13 = vector.load %arg9[%c0_12, %c0_13] : memref<8x128xf32, #tpu.memory_space<vmem>>, vector<8x128xf32>
    %c0_i32_14 = arith.constant 0 : i32
    %14 = arith.index_cast %c0_i32_14 : i32 to index
    %c0_15 = arith.constant 0 : index
    %c0_16 = arith.constant 0 : index
    %15 = vector.load %arg10[%14, %c0_15, %c0_16] : memref<4x8x128xf32, #tpu.memory_space<vmem>>, vector<1x8x128xf32>
    %16 = vector.shape_cast %15 : vector<1x8x128xf32> to vector<8x128xf32>
    %cst_17 = arith.constant dense<0.000000e+00> : vector<8x128xf32>
    %17 = tpu.matmul %13, %3, %cst_17 {dimension_numbers = #tpu.dot_dimension_numbers<[1], [0], [0], [1], [0, 0, 1, 1], [], []>} : vector<8x128xf32>, vector<128x128xf32>, vector<8x128xf32> -> vector<8x128xf32>
    %18 = arith.addf %16, %17 : vector<8x128xf32>
    %19 = math.tanh %18 : vector<8x128xf32>
    %20 = arith.index_cast %c0_i32_14 : i32 to index
    %c0_18 = arith.constant 0 : index
    %c0_19 = arith.constant 0 : index
    %21 = vector.load %arg10[%20, %c0_18, %c0_19] : memref<4x8x128xf32, #tpu.memory_space<vmem>>, vector<1x8x128xf32>
    %22 = vector.shape_cast %21 : vector<1x8x128xf32> to vector<8x128xf32>
    %23 = vector.shape_cast %19 : vector<8x128xf32> to vector<1x8x128xf32>
    tpu.vector_store %arg10[%20, %c0_18, %c0_19], %23 {strides = array<i32>} : memref<4x8x128xf32, #tpu.memory_space<vmem>>, vector<1x8x128xf32>,
    %c1_i32 = arith.constant 1 : i32
    %24 = arith.index_cast %c1_i32 : i32 to index
    %c0_20 = arith.constant 0 : index
    %c0_21 = arith.constant 0 : index
    %25 = vector.load %arg10[%24, %c0_20, %c0_21] : memref<4x8x128xf32, #tpu.memory_space<vmem>>, vector<1x8x128xf32>
    %26 = vector.shape_cast %25 : vector<1x8x128xf32> to vector<8x128xf32>
    %cst_22 = arith.constant dense<0.000000e+00> : vector<8x128xf32>
    %27 = tpu.matmul %19, %3, %cst_22 {dimension_numbers = #tpu.dot_dimension_numbers<[1], [0], [0], [1], [0, 0, 1, 1], [], []>} : vector<8x128xf32>, vector<128x128xf32>, vector<8x128xf32> -> vector<8x128xf32>
    %28 = arith.addf %26, %27 : vector<8x128xf32>
    %29 = math.tanh %28 : vector<8x128xf32>
    %30 = arith.index_cast %c1_i32 : i32 to index
    %c0_23 = arith.constant 0 : index
    %c0_24 = arith.constant 0 : index
    %31 = vector.load %arg10[%30, %c0_23, %c0_24] : memref<4x8x128xf32, #tpu.memory_space<vmem>>, vector<1x8x128xf32>
    %32 = vector.shape_cast %31 : vector<1x8x128xf32> to vector<8x128xf32>
    %33 = vector.shape_cast %29 : vector<8x128xf32> to vector<1x8x128xf32>
    tpu.vector_store %arg10[%30, %c0_23, %c0_24], %33 {strides = array<i32>} : memref<4x8x128xf32, #tpu.memory_space<vmem>>, vector<1x8x128xf32>,
    %c2_i32 = arith.constant 2 : i32
    %34 = arith.index_cast %c2_i32 : i32 to index
    %c0_25 = arith.constant 0 : index
    %c0_26 = arith.constant 0 : index
    %35 = vector.load %arg10[%34, %c0_25, %c0_26] : memref<4x8x128xf32, #tpu.memory_space<vmem>>, vector<1x8x128xf32>
    %36 = vector.shape_cast %35 : vector<1x8x128xf32> to vector<8x128xf32>
    %cst_27 = arith.constant dense<0.000000e+00> : vector<8x128xf32>
    %37 = tpu.matmul %29, %3, %cst_27 {dimension_numbers = #tpu.dot_dimension_numbers<[1], [0], [0], [1], [0, 0, 1, 1], [], []>} : vector<8x128xf32>, vector<128x128xf32>, vector<8x128xf32> -> vector<8x128xf32>
    %38 = arith.addf %36, %37 : vector<8x128xf32>
    %39 = math.tanh %38 : vector<8x128xf32>
    %40 = arith.index_cast %c2_i32 : i32 to index
    %c0_28 = arith.constant 0 : index
    %c0_29 = arith.constant 0 : index
    %41 = vector.load %arg10[%40, %c0_28, %c0_29] : memref<4x8x128xf32, #tpu.memory_space<vmem>>, vector<1x8x128xf32>
    %42 = vector.shape_cast %41 : vector<1x8x128xf32> to vector<8x128xf32>
    %43 = vector.shape_cast %39 : vector<8x128xf32> to vector<1x8x128xf32>
    tpu.vector_store %arg10[%40, %c0_28, %c0_29], %43 {strides = array<i32>} : memref<4x8x128xf32, #tpu.memory_space<vmem>>, vector<1x8x128xf32>,
    %c3_i32 = arith.constant 3 : i32
    %44 = arith.index_cast %c3_i32 : i32 to index
    %c0_30 = arith.constant 0 : index
    %c0_31 = arith.constant 0 : index
    %45 = vector.load %arg10[%44, %c0_30, %c0_31] : memref<4x8x128xf32, #tpu.memory_space<vmem>>, vector<1x8x128xf32>
    %46 = vector.shape_cast %45 : vector<1x8x128xf32> to vector<8x128xf32>
    %cst_32 = arith.constant dense<0.000000e+00> : vector<8x128xf32>
    %47 = tpu.matmul %39, %3, %cst_32 {dimension_numbers = #tpu.dot_dimension_numbers<[1], [0], [0], [1], [0, 0, 1, 1], [], []>} : vector<8x128xf32>, vector<128x128xf32>, vector<8x128xf32> -> vector<8x128xf32>
    %48 = arith.addf %46, %47 : vector<8x128xf32>
    %49 = math.tanh %48 : vector<8x128xf32>
    %50 = arith.index_cast %c3_i32 : i32 to index
    %c0_33 = arith.constant 0 : index
    %c0_34 = arith.constant 0 : index
    %51 = vector.load %arg10[%50, %c0_33, %c0_34] : memref<4x8x128xf32, #tpu.memory_space<vmem>>, vector<1x8x128xf32>
    %52 = vector.shape_cast %51 : vector<1x8x128xf32> to vector<8x128xf32>
    %53 = vector.shape_cast %49 : vector<8x128xf32> to vector<1x8x128xf32>
    tpu.vector_store %arg10[%50, %c0_33, %c0_34], %53 {strides = array<i32>} : memref<4x8x128xf32, #tpu.memory_space<vmem>>, vector<1x8x128xf32>,
    %c4_i32 = arith.constant 4 : i32
    %c0_35 = arith.constant 0 : index
    %c0_36 = arith.constant 0 : index
    %54 = vector.load %arg9[%c0_35, %c0_36] : memref<8x128xf32, #tpu.memory_space<vmem>>, vector<8x128xf32>
    tpu.vector_store %arg9[%c0_35, %c0_36], %49 {strides = array<i32>} : memref<8x128xf32, #tpu.memory_space<vmem>>, vector<8x128xf32>,
    %c0_37 = arith.constant 0 : index
    %c0_38 = arith.constant 0 : index
    %c0_39 = arith.constant 0 : index
    %55 = vector.load %arg10[%c0_37, %c0_38, %c0_39] : memref<4x8x128xf32, #tpu.memory_space<vmem>>, vector<4x8x128xf32>
    %56 = vector.shape_cast %55 : vector<4x8x128xf32> to vector<32x128xf32>
    %c0_40 = arith.constant 0 : index
    %c0_41 = arith.constant 0 : index
    %57 = vector.load %arg6[%c0_40, %c0_41] : memref<128x128xf32, #tpu.memory_space<vmem>>, vector<128x128xf32>
    %cst_42 = arith.constant dense<0.000000e+00> : vector<32x128xf32>
    %58 = tpu.matmul %56, %57, %cst_42 {dimension_numbers = #tpu.dot_dimension_numbers<[1], [0], [0], [1], [0, 0, 1, 1], [], []>} : vector<32x128xf32>, vector<128x128xf32>, vector<32x128xf32> -> vector<32x128xf32>
    %c0_43 = arith.constant 0 : index
    %c0_44 = arith.constant 0 : index
    %59 = vector.load %arg7[%c0_43, %c0_44] : memref<1x128xf32, #tpu.memory_space<vmem>>, vector<1x128xf32>
    %60 = vector.broadcast %59 : vector<1x128xf32> to vector<32x128xf32>
    %61 = arith.addf %58, %60 : vector<32x128xf32>
    %62 = vector.shape_cast %61 : vector<32x128xf32> to vector<4x8x128xf32>
    %c0_45 = arith.constant 0 : index
    %c0_46 = arith.constant 0 : index
    %c0_47 = arith.constant 0 : index
    %63 = vector.load %arg8[%c0_45, %c0_46, %c0_47] : memref<4x8x128xf32, #tpu.memory_space<vmem>>, vector<4x8x128xf32>
    tpu.vector_store %arg8[%c0_45, %c0_46, %c0_47], %62 {strides = array<i32>} : memref<4x8x128xf32, #tpu.memory_space<vmem>>, vector<4x8x128xf32>,
    return
  }
  func.func @transform_0(%arg0: i32, %arg1: i32) -> (i32, i32, i32) {
    %c0_i32 = arith.constant 0 : i32
    %c0_i32_0 = arith.constant 0 : i32
    return %arg1, %arg0, %c0_i32 : i32, i32, i32
  }
  func.func @transform_1(%arg0: i32, %arg1: i32) -> (i32, i32) {
    %c0_i32 = arith.constant 0 : i32
    %c0_i32_0 = arith.constant 0 : i32
    %c0_i32_1 = arith.constant 0 : i32
    return %c0_i32, %c0_i32_0 : i32, i32
  }
  func.func @transform_2(%arg0: i32, %arg1: i32) -> (i32, i32) {
    %c0_i32 = arith.constant 0 : i32
    %c0_i32_0 = arith.constant 0 : i32
    %c0_i32_1 = arith.constant 0 : i32
    return %c0_i32, %c0_i32_0 : i32, i32
  }
  func.func @transform_3(%arg0: i32, %arg1: i32) -> (i32, i32) {
    %c0_i32 = arith.constant 0 : i32
    %c0_i32_0 = arith.constant 0 : i32
    %c0_i32_1 = arith.constant 0 : i32
    return %c0_i32, %c0_i32_0 : i32, i32
  }
  func.func @transform_4(%arg0: i32, %arg1: i32) -> (i32, i32) {
    %c0_i32 = arith.constant 0 : i32
    %c0_i32_0 = arith.constant 0 : i32
    %c0_i32_1 = arith.constant 0 : i32
    return %c0_i32, %c0_i32_0 : i32, i32
  }
  func.func @transform_5(%arg0: i32, %arg1: i32) -> (i32, i32) {
    %c0_i32 = arith.constant 0 : i32
    %c0_i32_0 = arith.constant 0 : i32
    %c0_i32_1 = arith.constant 0 : i32
    return %c0_i32, %c0_i32_0 : i32, i32
  }
  func.func @transform_6(%arg0: i32, %arg1: i32) -> (i32, i32, i32) {
    %c0_i32 = arith.constant 0 : i32
    %c0_i32_0 = arith.constant 0 : i32
    return %arg1, %arg0, %c0_i32 : i32, i32, i32
  }
}

</mosaic_0001>

<llo_original>
// kernel: tpu_custom_call.1
$region0: #{tpu_custom_call.1}
  #allocation0 [shape = 'u32[]', space=smem, size = 0x4, offset = 0x4, fixed_abs, tag = 'smem constant byte address 0x4 - core index']
  #allocation1 [shape = 'u32[144,128]{1,0:T(1,128)}', space=vmem, size = 0x12000, scoped, tag = 'internal scratch']
  #allocation2 [shape = 'f32[8,128]{1,0:T(8,128)}', space=vmem, size = 0x1000, scoped, tag = 'scratch operand']
  #allocation3 [shape = 'f32[4,8,128]{2,1,0:T(8,128)}', space=vmem, size = 0x4000, scoped, tag = 'scratch operand']
  %s0 = inlined_call_operand.hbm [shape: f32[8,8,128], index: 0, kind: input, shape index: {}]
  %s1 = inlined_call_operand.hbm [shape: f32[128,128], index: 1, kind: input, shape index: {}]
  %s2 = inlined_call_operand.hbm [shape: f32[128,128], index: 2, kind: input, shape index: {}]
  %s3 = inlined_call_operand.vmem [shape: f32[1,128], index: 3, kind: input, shape index: {}]
  %s4 = inlined_call_operand.hbm [shape: f32[128,128], index: 4, kind: input, shape index: {}]
  %s5 = inlined_call_operand.vmem [shape: f32[1,128], index: 5, kind: input, shape index: {}]
  %s6 = inlined_call_operand.hbm [shape: f32[8,8,128], index: 6, kind: output, shape index: {}]
  %s7 = sld [smem:[#allocation0]]
  $region77: #{tpu_custom_call.1} parent=0
    _
  %s9 = ssub.s32 1, %s7
  %s10 = scalar_select 0, %s9, %s7
  $region1: #{tpu_custom_call.1} parent=0
    #allocation4 [shape = 'u8[32768]{0}', space=vmem, size = 0x8000, scoped, tag = 'input window, operand 0']
    #allocation5 [shape = 's32[2]{0}', space=sflag, size = 0x8, scoped, tag = 'scoped memory for tpu_custom_call.1']
    #allocation6 [shape = 's32[2]{0}', space=sflag, size = 0x8, scoped, tag = 'scoped memory for tpu_custom_call.1']
    #allocation7 [shape = 'u8[65536]{0}', space=vmem, size = 0x10000, scoped, tag = 'input window, operand 1, single buffered']
    #allocation8 [shape = 's32[1]{0}', space=sflag, size = 0x4, scoped, tag = 'scoped memory for tpu_custom_call.1']
    #allocation9 [shape = 'u8[65536]{0}', space=vmem, size = 0x10000, scoped, tag = 'input window, operand 2, single buffered']
    #allocation10 [shape = 'u8[65536]{0}', space=vmem, size = 0x10000, scoped, tag = 'input window, operand 4, single buffered']
    #allocation11 [shape = 's32[1]{0}', space=sflag, size = 0x4, scoped, tag = 'scoped memory for tpu_custom_call.1']
    #allocation12 [shape = 'u8[32768]{0}', space=vmem, size = 0x8000, scoped, tag = 'output window, operand 0']
    %11 = vsyncpa [#allocation5], 0
    %s12 = scalar_lea.sflag [#allocation5], 1
    %13 = vsyncpa %s12, 0
    %14 = vsyncpa [#allocation8], 0
    %15 = vsyncpa [#allocation11], 0
    %16 = vsyncpa [#allocation6], 0
    %s17 = scalar_lea.sflag [#allocation6], 1
    %18 = vsyncpa %s17, 0
    loop: start=0, step=1, limit=4
    $region2: #{tpu_custom_call.1} parent=1 // loop_pre_header
      _
    $region3: #{tpu_custom_call.1} parent=1 // loop_header
      %s20 = sphi 0, %s24
      %p21 = scmp.ge.s32.totalorder %s20, 4
      %s27 = sphi 0, %s39
      %s28 = sphi 0, %s35
      %s29 = sphi 0, %s27
      %s30 = sphi 0, %s28
      %s31 = sphi 0, %s29
      %s32 = sphi 0, %s30
      %s44 = sphi 0, %s46
      %s47 = sphi 0, %s44
      %s48 = sphi 0, %s47
      %s64 = sphi 0, %s48
      %s68 = sphi 0, %s68
      %s70 = sphi 0, %s68
      %s71 = sphi 0, %s70
      %s85 = sphi 0, %s71
      %s89 = sphi 0, %s89
      %s91 = sphi 0, %s89
      %s92 = sphi 0, %s91
      %s106 = sphi 0, %s92
      %s110 = sphi 0, %s110
      %s112 = sphi 0, %s110
      %s113 = sphi 0, %s112
      %s127 = sphi 0, %s113
      %s131 = sphi 0, %s131
      %s133 = sphi 0, %s131
      %s134 = sphi 0, %s133
      %s148 = sphi 0, %s134
      %s152 = sphi 0, %s152
      %s154 = sphi 0, %s152
      %s155 = sphi 0, %s154
      %s169 = sphi 0, %s155
      %s177 = sphi 0, %s179
      %s180 = sphi 0, %s177
      %s181 = sphi 0, %s180
      %s197 = sphi 0, %s181
    $region4: #{tpu_custom_call.1} parent=1 // loop_header_branch
      %23 = sbr.rel (%p21) target = $region8
    $region5: #{tpu_custom_call.1} parent=1 // loop_body
      %s25 = ssub.s32 %s20, 1
      %s26 = ssub.s32 %s20, 2
      %s33 = sadd.s32 1, %s28
      %p34 = scmp.ge.s32.totalorder %s33, 2
      %s35 = scalar_select %p34, 0, %s33
      %s36 = sadd.s32 1, %s27
      %s37 = scalar_select %p34, %s36, %s27
      %p38 = scmp.ge.s32.totalorder %s37, 1
      %s39 = scalar_select %p38, 0, %s37
      %s40 = ssub.s32 %s28, %s35
      %s41 = ssub.s32 %s27, %s39
      %s42 = sor.u32 %s40, %s41
      %p43 = scmp.eq.s32.totalorder %s42, 0
      %s45 = sadd.s32 %s44, 1
      %s46 = scalar_select %p43, %s44, %s45
      %p49 = pneg %p43
      %p50 = scmp.eq.s32.totalorder %s20, 1
      %p51 = por %p49, %p50
      %p52 = scmp.ne.s32.totalorder %s44, %s47
      %p53 = scmp.eq.s32.totalorder %s20, 0
      %p54 = por %p52, %p53
      %p55 = scmp.ne.s32.totalorder %s44, %s47
      %p56 = scmp.eq.s32.totalorder %s25, 1
      %p57 = por %p55, %p56
      %p58 = scmp.ne.s32.totalorder %s47, %s48
      %p59 = scmp.eq.s32.totalorder %s25, 0
      %p60 = por %p58, %p59
      %p61 = scmp.ne.s32.totalorder %s47, %s48
      %p62 = scmp.eq.s32.totalorder %s26, 1
      %p63 = por %p61, %p62
      %p65 = scmp.ne.s32.totalorder %s48, %s64
      %p66 = scmp.eq.s32.totalorder %s26, 0
      %p67 = por %p65, %p66
      %s69 = sadd.s32 %s68, 1
      %p72 = scmp.eq.s32.totalorder %s20, 1
      %p73 = scmp.ne.s32.totalorder %s68, %s70
      %p74 = scmp.eq.s32.totalorder %s20, 0
      %p75 = por %p73, %p74
      %p76 = scmp.ne.s32.totalorder %s68, %s70
      %p77 = scmp.eq.s32.totalorder %s25, 1
      %p78 = por %p76, %p77
      %p79 = scmp.ne.s32.totalorder %s70, %s71
      %p80 = scmp.eq.s32.totalorder %s25, 0
      %p81 = por %p79, %p80
      %p82 = scmp.ne.s32.totalorder %s70, %s71
      %p83 = scmp.eq.s32.totalorder %s26, 1
      %p84 = por %p82, %p83
      %p86 = scmp.ne.s32.totalorder %s71, %s85
      %p87 = scmp.eq.s32.totalorder %s26, 0
      %p88 = por %p86, %p87
      %s90 = sadd.s32 %s89, 1
      %p93 = scmp.eq.s32.totalorder %s20, 1
      %p94 = scmp.ne.s32.totalorder %s89, %s91
      %p95 = scmp.eq.s32.totalorder %s20, 0
      %p96 = por %p94, %p95
      %p97 = scmp.ne.s32.totalorder %s89, %s91
      %p98 = scmp.eq.s32.totalorder %s25, 1
      %p99 = por %p97, %p98
      %p100 = scmp.ne.s32.totalorder %s91, %s92
      %p101 = scmp.eq.s32.totalorder %s25, 0
      %p102 = por %p100, %p101
      %p103 = scmp.ne.s32.totalorder %s91, %s92
      %p104 = scmp.eq.s32.totalorder %s26, 1
      %p105 = por %p103, %p104
      %p107 = scmp.ne.s32.totalorder %s92, %s106
      %p108 = scmp.eq.s32.totalorder %s26, 0
      %p109 = por %p107, %p108
      %s111 = sadd.s32 %s110, 1
      %p114 = scmp.eq.s32.totalorder %s20, 1
      %p115 = scmp.ne.s32.totalorder %s110, %s112
      %p116 = scmp.eq.s32.totalorder %s20, 0
      %p117 = por %p115, %p116
      %p118 = scmp.ne.s32.totalorder %s110, %s112
      %p119 = scmp.eq.s32.totalorder %s25, 1
      %p120 = por %p118, %p119
      %p121 = scmp.ne.s32.totalorder %s112, %s113
      %p122 = scmp.eq.s32.totalorder %s25, 0
      %p123 = por %p121, %p122
      %p124 = scmp.ne.s32.totalorder %s112, %s113
      %p125 = scmp.eq.s32.totalorder %s26, 1
      %p126 = por %p124, %p125
      %p128 = scmp.ne.s32.totalorder %s113, %s127
      %p129 = scmp.eq.s32.totalorder %s26, 0
      %p130 = por %p128, %p129
      %s132 = sadd.s32 %s131, 1
      %p135 = scmp.eq.s32.totalorder %s20, 1
      %p136 = scmp.ne.s32.totalorder %s131, %s133
      %p137 = scmp.eq.s32.totalorder %s20, 0
      %p138 = por %p136, %p137
      %p139 = scmp.ne.s32.totalorder %s131, %s133
      %p140 = scmp.eq.s32.totalorder %s25, 1
      %p141 = por %p139, %p140
      %p142 = scmp.ne.s32.totalorder %s133, %s134
      %p143 = scmp.eq.s32.totalorder %s25, 0
      %p144 = por %p142, %p143
      %p145 = scmp.ne.s32.totalorder %s133, %s134
      %p146 = scmp.eq.s32.totalorder %s26, 1
      %p147 = por %p145, %p146
      %p149 = scmp.ne.s32.totalorder %s134, %s148
      %p150 = scmp.eq.s32.totalorder %s26, 0
      %p151 = por %p149, %p150
      %s153 = sadd.s32 %s152, 1
      %p156 = scmp.eq.s32.totalorder %s20, 1
      %p157 = scmp.ne.s32.totalorder %s152, %s154
      %p158 = scmp.eq.s32.totalorder %s20, 0
      %p159 = por %p157, %p158
      %p160 = scmp.ne.s32.totalorder %s152, %s154
      %p161 = scmp.eq.s32.totalorder %s25, 1
      %p162 = por %p160, %p161
      %p163 = scmp.ne.s32.totalorder %s154, %s155
      %p164 = scmp.eq.s32.totalorder %s25, 0
      %p165 = por %p163, %p164
      %p166 = scmp.ne.s32.totalorder %s154, %s155
      %p167 = scmp.eq.s32.totalorder %s26, 1
      %p168 = por %p166, %p167
      %p170 = scmp.ne.s32.totalorder %s155, %s169
      %p171 = scmp.eq.s32.totalorder %s26, 0
      %p172 = por %p170, %p171
      %s173 = ssub.s32 %s28, %s35
      %s174 = ssub.s32 %s27, %s39
      %s175 = sor.u32 %s173, %s174
      %p176 = scmp.eq.s32.totalorder %s175, 0
      %s178 = sadd.s32 %s177, 1
      %s179 = scalar_select %p176, %s177, %s178
      %p182 = pneg %p176
      %p183 = scmp.eq.s32.totalorder %s20, 1
      %p184 = por %p182, %p183
      %p185 = scmp.ne.s32.totalorder %s177, %s180
      %p186 = scmp.eq.s32.totalorder %s20, 0
      %p187 = por %p185, %p186
      %p188 = scmp.ne.s32.totalorder %s177, %s180
      %p189 = scmp.eq.s32.totalorder %s25, 1
      %p190 = por %p188, %p189
      %p191 = scmp.ne.s32.totalorder %s180, %s181
      %p192 = scmp.eq.s32.totalorder %s25, 0
      %p193 = por %p191, %p192
      %p194 = scmp.ne.s32.totalorder %s180, %s181
      %p195 = scmp.eq.s32.totalorder %s26, 1
      %p196 = por %p194, %p195
      %p198 = scmp.ne.s32.totalorder %s181, %s197
      %p199 = scmp.eq.s32.totalorder %s26, 0
      %p200 = por %p198, %p199
      %p201 = scmp.le.s32.totalorder 1, %s20
      %p202 = scmp.lt.s32.totalorder %s20, 3
      %p203 = pnand %p201, %p202
      %p204 = pneg %p203
      // Predicated region
      $region9: #{tpu_custom_call.1} parent=5 // pred_check
        _
      $region10: #{tpu_custom_call.1} parent=5 // pred_check_branch
        %206 = sbr.rel (%p203) target = $region12
      $region11: #{tpu_custom_call.1} parent=5 // pred_region
        %s207 = ssub.s32 %s20, 1
        // Predicated region
        $region13: #{tpu_custom_call.1} parent=11 // pred_check
          %p208 = pneg %p81
        $region14: #{tpu_custom_call.1} parent=11 // pred_check_branch
          %210 = sbr.rel (%p208) target = $region16
        $region15: #{tpu_custom_call.1} parent=11 // pred_region
          %s212 = ssub.s32 2048, 2048
          %213 = vsyncadd [#allocation8], %s212
          %s214 = sshll.u32 [#allocation7], 4
          %s215 = int_to_ptr.vmem [resolvable:$true] %s214
          %220 = dma.hbm_to_vmem [thread:$0]  %s1, 2048, %s215, [#allocation8], 128, 128, 8
        $region16: #{tpu_custom_call.1} parent=11 // pred_fallthru
          _
        // Predicated region
        $region17: #{tpu_custom_call.1} parent=11 // pred_check
          %p221 = pneg %p102
        $region18: #{tpu_custom_call.1} parent=11 // pred_check_branch
          %223 = sbr.rel (%p221) target = $region20
        $region19: #{tpu_custom_call.1} parent=11 // pred_region
          %s225 = ssub.s32 2048, 2048
          %226 = vsyncadd [#allocation8], %s225
          %s227 = sshll.u32 [#allocation9], 4
          %s228 = int_to_ptr.vmem [resolvable:$true] %s227
          %233 = dma.hbm_to_vmem [thread:$0]  %s2, 2048, %s228, [#allocation8], 128, 128, 8
        $region20: #{tpu_custom_call.1} parent=11 // pred_fallthru
          _
        // Predicated region
        $region21: #{tpu_custom_call.1} parent=11 // pred_check
          %p234 = pneg %p123
        $region22: #{tpu_custom_call.1} parent=11 // pred_check_branch
          %236 = sbr.rel (%p234) target = $region24
        $region23: #{tpu_custom_call.1} parent=11 // pred_region
          _
        $region24: #{tpu_custom_call.1} parent=11 // pred_fallthru
          _
        // Predicated region
        $region25: #{tpu_custom_call.1} parent=11 // pred_check
          %p237 = pneg %p144
        $region26: #{tpu_custom_call.1} parent=11 // pred_check_branch
          %239 = sbr.rel (%p237) target = $region28
        $region27: #{tpu_custom_call.1} parent=11 // pred_region
          %s241 = ssub.s32 2048, 2048
          %242 = vsyncadd [#allocation11], %s241
          %s243 = sshll.u32 [#allocation10], 4
          %s244 = int_to_ptr.vmem [resolvable:$true] %s243
          %249 = dma.hbm_to_vmem [thread:$0]  %s4, 2048, %s244, [#allocation11], 128, 128, 8
        $region28: #{tpu_custom_call.1} parent=11 // pred_fallthru
          _
        // Predicated region
        $region29: #{tpu_custom_call.1} parent=11 // pred_check
          %p250 = pneg %p165
        $region30: #{tpu_custom_call.1} parent=11 // pred_check_branch
          %252 = sbr.rel (%p250) target = $region32
        $region31: #{tpu_custom_call.1} parent=11 // pred_region
          _
        $region32: #{tpu_custom_call.1} parent=11 // pred_fallthru
          _
      $region12: #{tpu_custom_call.1} parent=5 // pred_fallthru
        _
      %p253 = scmp.lt.s32.totalorder %s20, 2
      // Predicated region
      $region33: #{tpu_custom_call.1} parent=5 // pred_check
        %p254 = pneg %p253
      $region34: #{tpu_custom_call.1} parent=5 // pred_check_branch
        %256 = sbr.rel (%p254) target = $region36
      $region35: #{tpu_custom_call.1} parent=5 // pred_region
        // Predicated region
        $region37: #{tpu_custom_call.1} parent=35 // pred_check
          %p257 = pneg %p54
        $region38: #{tpu_custom_call.1} parent=35 // pred_check_branch
          %259 = sbr.rel (%p257) target = $region40
        $region39: #{tpu_custom_call.1} parent=35 // pred_region
          %s260 = sand.u32 %s44, 1
          %s261 = scalar_lea.sflag [#allocation5], %s260
          %s262 = sand.u32 %s44, 1
          %s263 = smul.addr %s262, 32
          %s264 = scalar_lea.vmem [#allocation4], %s263
          %s265 = smul.u32 4, %s28
          %s267 = ssub.s32 512, 512
          %268 = vsyncadd %s261, %s267
          %s269 = sadd.s32 %s27, %s265
          %s270 = smul.addr %s269, 128
          %s271 = scalar_lea.hbm %s0, %s270
          %s272 = sshll.u32 %s264, 4
          %s273 = int_to_ptr.vmem [resolvable:$true] %s272
          %278 = dma.hbm_to_vmem [thread:$0]  %s271, 512, %s273, %s261, 128, 128, 8
        $region40: #{tpu_custom_call.1} parent=35 // pred_fallthru
          _
      $region36: #{tpu_custom_call.1} parent=5 // pred_fallthru
        _
      %p279 = scmp.le.s32.totalorder 1, %s20
      %p280 = scmp.lt.s32.totalorder %s20, 3
      %p281 = pnand %p279, %p280
      %p282 = pneg %p281
      // Predicated region
      $region41: #{tpu_custom_call.1} parent=5 // pred_check
        _
      $region42: #{tpu_custom_call.1} parent=5 // pred_check_branch
        %284 = sbr.rel (%p281) target = $region44
      $region43: #{tpu_custom_call.1} parent=5 // pred_region
        %s285 = ssub.s32 %s20, 1
        %s286 = sand.u32 %s47, 1
        %s287 = scalar_lea.sflag [#allocation5], %s286
        %s288 = sand.u32 %s47, 1
        %s289 = smul.addr %s288, 32
        %s290 = scalar_lea.vmem [#allocation4], %s289
        // Predicated region
        $region45: #{tpu_custom_call.1} parent=43 // pred_check
          %p291 = pneg %p60
        $region46: #{tpu_custom_call.1} parent=43 // pred_check_branch
          %293 = sbr.rel (%p291) target = $region48
        $region47: #{tpu_custom_call.1} parent=43 // pred_region
          %294 = dma.done %s287, 512
        $region48: #{tpu_custom_call.1} parent=43 // pred_fallthru
          _
        // Predicated region
        $region49: #{tpu_custom_call.1} parent=43 // pred_check
          %p295 = pneg %p81
        $region50: #{tpu_custom_call.1} parent=43 // pred_check_branch
          %297 = sbr.rel (%p295) target = $region52
        $region51: #{tpu_custom_call.1} parent=43 // pred_region
          %298 = dma.done [#allocation8], 2048
        $region52: #{tpu_custom_call.1} parent=43 // pred_fallthru
          _
        // Predicated region
        $region53: #{tpu_custom_call.1} parent=43 // pred_check
          %p299 = pneg %p102
        $region54: #{tpu_custom_call.1} parent=43 // pred_check_branch
          %301 = sbr.rel (%p299) target = $region56
        $region55: #{tpu_custom_call.1} parent=43 // pred_region
          %302 = dma.done [#allocation8], 2048
        $region56: #{tpu_custom_call.1} parent=43 // pred_fallthru
          _
        // Predicated region
        $region57: #{tpu_custom_call.1} parent=43 // pred_check
          %p303 = pneg %p144
        $region58: #{tpu_custom_call.1} parent=43 // pred_check_branch
          %305 = sbr.rel (%p303) target = $region60
        $region59: #{tpu_custom_call.1} parent=43 // pred_region
          %306 = dma.done [#allocation11], 2048
        $region60: #{tpu_custom_call.1} parent=43 // pred_fallthru
          _
        %s307 = sand.u32 %s47, 1
        %s308 = scalar_lea.sflag [#allocation5], %s307
        %s309 = sand.u32 %s47, 1
        %s310 = smul.addr %s309, 32
        %s311 = scalar_lea.vmem [#allocation4], %s310
        %p312 = pneg %p60
        %p313 = pneg %p57
        %p314 = pneg %p81
        %p315 = pneg %p78
        %p316 = pneg %p102
        %p317 = pneg %p99
        %p318 = pneg %p123
        %p319 = pneg %p120
        %p320 = pneg %p144
        %p321 = pneg %p141
        %p322 = pneg %p165
        %p323 = pneg %p162
        %p324 = pneg %p193
        %p325 = pneg %p190
        %s326 = sand.u32 %s180, 1
        %s327 = scalar_lea.sflag [#allocation6], %s326
        %s328 = sand.u32 %s180, 1
        %s329 = smul.addr %s328, 32
        %s330 = scalar_lea.vmem [#allocation12], %s329
        %s331 = smul.u32 4, %s30
        %s332 = smul.u32 4, %s30
        %p333 = scmp.eq.s32.totalorder %s30, 0
        // Predicated region
        $region61: #{tpu_custom_call.1} parent=43 // pred_check
          %p334 = pneg %p333
        $region62: #{tpu_custom_call.1} parent=43 // pred_check_branch
          %336 = sbr.rel (%p334) target = $region64
        $region63: #{tpu_custom_call.1} parent=43 // pred_region
          %337 = vst [vmem:[#allocation2] sm:$0xff] 0.0
        $region64: #{tpu_custom_call.1} parent=43 // pred_fallthru
          _
        %v338 = vld [vmem:[#allocation9] sm:$0xff]
        %v339 = vld [vmem:[#allocation9 + $0x8] sm:$0xff]
        %v340 = vld [vmem:[#allocation9 + $0x10] sm:$0xff]
        %v341 = vld [vmem:[#allocation9 + $0x18] sm:$0xff]
        %v342 = vld [vmem:[#allocation9 + $0x20] sm:$0xff]
        %v343 = vld [vmem:[#allocation9 + $0x28] sm:$0xff]
        %v344 = vld [vmem:[#allocation9 + $0x30] sm:$0xff]
        %v345 = vld [vmem:[#allocation9 + $0x38] sm:$0xff]
        %v346 = vld [vmem:[#allocation9 + $0x40] sm:$0xff]
        %v347 = vld [vmem:[#allocation9 + $0x48] sm:$0xff]
        %v348 = vld [vmem:[#allocation9 + $0x50] sm:$0xff]
        %v349 = vld [vmem:[#allocation9 + $0x58] sm:$0xff]
        %v350 = vld [vmem:[#allocation9 + $0x60] sm:$0xff]
        %v351 = vld [vmem:[#allocation9 + $0x68] sm:$0xff]
        %v352 = vld [vmem:[#allocation9 + $0x70] sm:$0xff]
        %v353 = vld [vmem:[#allocation9 + $0x78] sm:$0xff]
        %v354 = vld [vmem:[%s290] sm:$0xff]
        %v355 = vld [vmem:[%s290 + $0x8] sm:$0xff]
        %v356 = vld [vmem:[%s290 + $0x10] sm:$0xff]
        %v357 = vld [vmem:[%s290 + $0x18] sm:$0xff]
        %v358 = vld [vmem:[#allocation7] sm:$0xff]
        %v359 = vld [vmem:[#allocation7 + $0x8] sm:$0xff]
        %v360 = vld [vmem:[#allocation7 + $0x10] sm:$0xff]
        %v361 = vld [vmem:[#allocation7 + $0x18] sm:$0xff]
        %v362 = vld [vmem:[#allocation7 + $0x20] sm:$0xff]
        %v363 = vld [vmem:[#allocation7 + $0x28] sm:$0xff]
        %v364 = vld [vmem:[#allocation7 + $0x30] sm:$0xff]
        %v365 = vld [vmem:[#allocation7 + $0x38] sm:$0xff]
        %v366 = vld [vmem:[#allocation7 + $0x40] sm:$0xff]
        %v367 = vld [vmem:[#allocation7 + $0x48] sm:$0xff]
        %v368 = vld [vmem:[#allocation7 + $0x50] sm:$0xff]
        %v369 = vld [vmem:[#allocation7 + $0x58] sm:$0xff]
        %v370 = vld [vmem:[#allocation7 + $0x60] sm:$0xff]
        %v371 = vld [vmem:[#allocation7 + $0x68] sm:$0xff]
        %v372 = vld [vmem:[#allocation7 + $0x70] sm:$0xff]
        %v373 = vld [vmem:[#allocation7 + $0x78] sm:$0xff]
        %v374 = vld [vmem:[%s3] sm:$0x1]
        %v376 = vlaneseq
        %v377 = vshrl.u32 %v376, 7
        %v378 = vsub.s32 0, %v377
        %v379 = vrot.slane %v374, %v378
        %381 = vmatprep.subr.mxu0 0.0
        %382 = vmatpush1.msra.mxu0 %v358
        %383 = vmatprep.subr.mxu0 0.0
        %384 = vmatpush1.msra.mxu0 %v359
        %385 = vmatprep.subr.mxu0 0.0
        %386 = vmatpush1.msra.mxu0 %v360
        %387 = vmatprep.subr.mxu0 0.0
        %388 = vmatpush1.msra.mxu0 %v361
        %389 = vmatprep.subr.mxu0 0.0
        %390 = vmatpush1.msra.mxu0 %v362
        %391 = vmatprep.subr.mxu0 0.0
        %392 = vmatpush1.msra.mxu0 %v363
        %393 = vmatprep.subr.mxu0 0.0
        %394 = vmatpush1.msra.mxu0 %v364
        %395 = vmatprep.subr.mxu0 0.0
        %396 = vmatpush1.msra.mxu0 %v365
        %397 = vmatprep.subr.mxu0 0.0
        %398 = vmatpush1.msra.mxu0 %v366
        %399 = vmatprep.subr.mxu0 0.0
        %400 = vmatpush1.msra.mxu0 %v367
        %401 = vmatprep.subr.mxu0 0.0
        %402 = vmatpush1.msra.mxu0 %v368
        %403 = vmatprep.subr.mxu0 0.0
        %404 = vmatpush1.msra.mxu0 %v369
        %405 = vmatprep.subr.mxu0 0.0
        %406 = vmatpush1.msra.mxu0 %v370
        %407 = vmatprep.subr.mxu0 0.0
        %408 = vmatpush1.msra.mxu0 %v371
        %409 = vmatprep.subr.mxu0 0.0
        %410 = vmatpush1.msra.mxu0 %v372
        %411 = vmatprep.subr.mxu0 0.0
        %412 = vmatpush1.msra.mxu0 %v373
        %413 = vmatprep.subr.mxu0 0.0
        %414 = vmatpush1.msra.mxu0 0.0
        %415 = vmatprep.subr.mxu0 0.0
        %416 = vmatpush1.msra.mxu0 0.0
        %417 = vmatprep.subr.mxu0 0.0
        %418 = vmatpush1.msra.mxu0 0.0
        %419 = vmatprep.subr.mxu0 0.0
        %420 = vmatpush1.msra.mxu0 0.0
        %421 = vmatprep.subr.mxu0 0.0
        %422 = vmatpush1.msra.mxu0 0.0
        %423 = vmatprep.subr.mxu0 0.0
        %424 = vmatpush1.msra.mxu0 0.0
        %425 = vmatprep.subr.mxu0 0.0
        %426 = vmatpush1.msra.mxu0 0.0
        %427 = vmatprep.subr.mxu0 0.0
        %428 = vmatpush1.msra.mxu0 0.0
        %429 = vmatprep.subr.mxu0 0.0
        %430 = vmatpush1.msra.mxu0 0.0
        %431 = vmatprep.subr.mxu0 0.0
        %432 = vmatpush1.msra.mxu0 0.0
        %433 = vmatprep.subr.mxu0 0.0
        %434 = vmatpush1.msra.mxu0 0.0
        %435 = vmatprep.subr.mxu0 0.0
        %436 = vmatpush1.msra.mxu0 0.0
        %437 = vmatprep.subr.mxu0 0.0
        %438 = vmatpush1.msra.mxu0 0.0
        %439 = vmatprep.subr.mxu0 0.0
        %440 = vmatpush1.msra.mxu0 0.0
        %441 = vmatprep.subr.mxu0 0.0
        %442 = vmatpush1.msra.mxu0 0.0
        %443 = vmatprep.subr.mxu0 0.0
        %444 = vmatpush1.msra.mxu0 0.0
        %445 = vmatprep.mubr.f32.mxu0 0.0
        %446 = vmatmul.mubr.f32.gmra.mrb[0].mxu0 %v354
        %v447 = vpop.f32.mrb[0].mxu0
        %v448 = vadd.f32 %v379, %v447
        %v449 = vpop.f32.mrb[0].mxu0
        %450 = vmatprep.mubr.f32.mxu0 0.0
        %451 = vmatmul.mubr.f32.gmra.mrb[0].mxu0 %v355
        %v452 = vpop.f32.mrb[0].mxu0
        %v453 = vadd.f32 %v379, %v452
        %v454 = vpop.f32.mrb[0].mxu0
        %455 = vmatprep.mubr.f32.mxu0 0.0
        %456 = vmatmul.mubr.f32.gmra.mrb[0].mxu0 %v356
        %v457 = vpop.f32.mrb[0].mxu0
        %v458 = vadd.f32 %v379, %v457
        %v459 = vpop.f32.mrb[0].mxu0
        %460 = vmatprep.mubr.f32.mxu0 0.0
        %461 = vmatmul.mubr.f32.gmra.mrb[0].mxu0 %v357
        %v462 = vpop.f32.mrb[0].mxu0
        %v463 = vadd.f32 %v379, %v462
        %v464 = vpop.f32.mrb[0].mxu0
        %465 = vdwg.mxu0
        %466 = vst [vmem:[#allocation3] sm:$0xff] %v448
        %467 = vst [vmem:[#allocation3 + $0x8] sm:$0xff] %v453
        %468 = vst [vmem:[#allocation3 + $0x10] sm:$0xff] %v458
        %469 = vst [vmem:[#allocation3 + $0x18] sm:$0xff] %v463
        %v470 = vld [vmem:[#allocation2] sm:$0xff]
        %v471 = vld [vmem:[#allocation3] sm:$0xff]
        %472 = vmatprep.subr.mxu0 0.0
        %473 = vmatpush1.msra.mxu0 %v338
        %474 = vmatprep.subr.mxu0 0.0
        %475 = vmatpush1.msra.mxu0 %v339
        %476 = vmatprep.subr.mxu0 0.0
        %477 = vmatpush1.msra.mxu0 %v340
        %478 = vmatprep.subr.mxu0 0.0
        %479 = vmatpush1.msra.mxu0 %v341
        %480 = vmatprep.subr.mxu0 0.0
        %481 = vmatpush1.msra.mxu0 %v342
        %482 = vmatprep.subr.mxu0 0.0
        %483 = vmatpush1.msra.mxu0 %v343
        %484 = vmatprep.subr.mxu0 0.0
        %485 = vmatpush1.msra.mxu0 %v344
        %486 = vmatprep.subr.mxu0 0.0
        %487 = vmatpush1.msra.mxu0 %v345
        %488 = vmatprep.subr.mxu0 0.0
        %489 = vmatpush1.msra.mxu0 %v346
        %490 = vmatprep.subr.mxu0 0.0
        %491 = vmatpush1.msra.mxu0 %v347
        %492 = vmatprep.subr.mxu0 0.0
        %493 = vmatpush1.msra.mxu0 %v348
        %494 = vmatprep.subr.mxu0 0.0
        %495 = vmatpush1.msra.mxu0 %v349
        %496 = vmatprep.subr.mxu0 0.0
        %497 = vmatpush1.msra.mxu0 %v350
        %498 = vmatprep.subr.mxu0 0.0
        %499 = vmatpush1.msra.mxu0 %v351
        %500 = vmatprep.subr.mxu0 0.0
        %501 = vmatpush1.msra.mxu0 %v352
        %502 = vmatprep.subr.mxu0 0.0
        %503 = vmatpush1.msra.mxu0 %v353
        %504 = vmatprep.subr.mxu0 0.0
        %505 = vmatpush1.msra.mxu0 0.0
        %506 = vmatprep.subr.mxu0 0.0
        %507 = vmatpush1.msra.mxu0 0.0
        %508 = vmatprep.subr.mxu0 0.0
        %509 = vmatpush1.msra.mxu0 0.0
        %510 = vmatprep.subr.mxu0 0.0
        %511 = vmatpush1.msra.mxu0 0.0
        %512 = vmatprep.subr.mxu0 0.0
        %513 = vmatpush1.msra.mxu0 0.0
        %514 = vmatprep.subr.mxu0 0.0
        %515 = vmatpush1.msra.mxu0 0.0
        %516 = vmatprep.subr.mxu0 0.0
        %517 = vmatpush1.msra.mxu0 0.0
        %518 = vmatprep.subr.mxu0 0.0
        %519 = vmatpush1.msra.mxu0 0.0
        %520 = vmatprep.subr.mxu0 0.0
        %521 = vmatpush1.msra.mxu0 0.0
        %522 = vmatprep.subr.mxu0 0.0
        %523 = vmatpush1.msra.mxu0 0.0
        %524 = vmatprep.subr.mxu0 0.0
        %525 = vmatpush1.msra.mxu0 0.0
        %526 = vmatprep.subr.mxu0 0.0
        %527 = vmatpush1.msra.mxu0 0.0
        %528 = vmatprep.subr.mxu0 0.0
        %529 = vmatpush1.msra.mxu0 0.0
        %530 = vmatprep.subr.mxu0 0.0
        %531 = vmatpush1.msra.mxu0 0.0
        %532 = vmatprep.subr.mxu0 0.0
        %533 = vmatpush1.msra.mxu0 0.0
        %534 = vmatprep.subr.mxu0 0.0
        %535 = vmatpush1.msra.mxu0 0.0
        %536 = vmatprep.mubr.f32.mxu0 0.0
        %537 = vmatmul.mubr.f32.gmra.mrb[0].mxu0 %v470
        %v538 = vpop.f32.mrb[0].mxu0
        %v539 = vadd.f32 0.0, %v538
        %v540 = vpop.f32.mrb[0].mxu0
        %541 = vdwg.mxu0
        %v542 = vadd.f32 %v471, %v539
        %v543 = vtanh.pop %v542
        %544 = vst [vmem:[#allocation3] sm:$0xff] %v543
        %s545 = scalar_lea.vmem [#allocation3], 8
        %v546 = vld [vmem:[%s545] sm:$0xff]
        %547 = vmatprep.subr.mxu0 0.0
        %548 = vmatpush1.msra.mxu0 %v338
        %549 = vmatprep.subr.mxu0 0.0
        %550 = vmatpush1.msra.mxu0 %v339
        %551 = vmatprep.subr.mxu0 0.0
        %552 = vmatpush1.msra.mxu0 %v340
        %553 = vmatprep.subr.mxu0 0.0
        %554 = vmatpush1.msra.mxu0 %v341
        %555 = vmatprep.subr.mxu0 0.0
        %556 = vmatpush1.msra.mxu0 %v342
        %557 = vmatprep.subr.mxu0 0.0
        %558 = vmatpush1.msra.mxu0 %v343
        %559 = vmatprep.subr.mxu0 0.0
        %560 = vmatpush1.msra.mxu0 %v344
        %561 = vmatprep.subr.mxu0 0.0
        %562 = vmatpush1.msra.mxu0 %v345
        %563 = vmatprep.subr.mxu0 0.0
        %564 = vmatpush1.msra.mxu0 %v346
        %565 = vmatprep.subr.mxu0 0.0
        %566 = vmatpush1.msra.mxu0 %v347
        %567 = vmatprep.subr.mxu0 0.0
        %568 = vmatpush1.msra.mxu0 %v348
        %569 = vmatprep.subr.mxu0 0.0
        %570 = vmatpush1.msra.mxu0 %v349
        %571 = vmatprep.subr.mxu0 0.0
        %572 = vmatpush1.msra.mxu0 %v350
        %573 = vmatprep.subr.mxu0 0.0
        %574 = vmatpush1.msra.mxu0 %v351
        %575 = vmatprep.subr.mxu0 0.0
        %576 = vmatpush1.msra.mxu0 %v352
        %577 = vmatprep.subr.mxu0 0.0
        %578 = vmatpush1.msra.mxu0 %v353
        %579 = vmatprep.subr.mxu0 0.0
        %580 = vmatpush1.msra.mxu0 0.0
        %581 = vmatprep.subr.mxu0 0.0
        %582 = vmatpush1.msra.mxu0 0.0
        %583 = vmatprep.subr.mxu0 0.0
        %584 = vmatpush1.msra.mxu0 0.0
        %585 = vmatprep.subr.mxu0 0.0
        %586 = vmatpush1.msra.mxu0 0.0
        %587 = vmatprep.subr.mxu0 0.0
        %588 = vmatpush1.msra.mxu0 0.0
        %589 = vmatprep.subr.mxu0 0.0
        %590 = vmatpush1.msra.mxu0 0.0
        %591 = vmatprep.subr.mxu0 0.0
        %592 = vmatpush1.msra.mxu0 0.0
        %593 = vmatprep.subr.mxu0 0.0
        %594 = vmatpush1.msra.mxu0 0.0
        %595 = vmatprep.subr.mxu0 0.0
        %596 = vmatpush1.msra.mxu0 0.0
        %597 = vmatprep.subr.mxu0 0.0
        %598 = vmatpush1.msra.mxu0 0.0
        %599 = vmatprep.subr.mxu0 0.0
        %600 = vmatpush1.msra.mxu0 0.0
        %601 = vmatprep.subr.mxu0 0.0
        %602 = vmatpush1.msra.mxu0 0.0
        %603 = vmatprep.subr.mxu0 0.0
        %604 = vmatpush1.msra.mxu0 0.0
        %605 = vmatprep.subr.mxu0 0.0
        %606 = vmatpush1.msra.mxu0 0.0
        %607 = vmatprep.subr.mxu0 0.0
        %608 = vmatpush1.msra.mxu0 0.0
        %609 = vmatprep.subr.mxu0 0.0
        %610 = vmatpush1.msra.mxu0 0.0
        %611 = vmatprep.mubr.f32.mxu0 0.0
        %612 = vmatmul.mubr.f32.gmra.mrb[0].mxu0 %v543
        %v613 = vpop.f32.mrb[0].mxu0
        %v614 = vadd.f32 0.0, %v613
        %v615 = vpop.f32.mrb[0].mxu0
        %616 = vdwg.mxu0
        %v617 = vadd.f32 %v546, %v614
        %v618 = vtanh.pop %v617
        %619 = vst [vmem:[%s545] sm:$0xff] %v618
        %s620 = scalar_lea.vmem [#allocation3], 16
        %v621 = vld [vmem:[%s620] sm:$0xff]
        %622 = vmatprep.subr.mxu0 0.0
        %623 = vmatpush1.msra.mxu0 %v338
        %624 = vmatprep.subr.mxu0 0.0
        %625 = vmatpush1.msra.mxu0 %v339
        %626 = vmatprep.subr.mxu0 0.0
        %627 = vmatpush1.msra.mxu0 %v340
        %628 = vmatprep.subr.mxu0 0.0
        %629 = vmatpush1.msra.mxu0 %v341
        %630 = vmatprep.subr.mxu0 0.0
        %631 = vmatpush1.msra.mxu0 %v342
        %632 = vmatprep.subr.mxu0 0.0
        %633 = vmatpush1.msra.mxu0 %v343
        %634 = vmatprep.subr.mxu0 0.0
        %635 = vmatpush1.msra.mxu0 %v344
        %636 = vmatprep.subr.mxu0 0.0
        %637 = vmatpush1.msra.mxu0 %v345
        %638 = vmatprep.subr.mxu0 0.0
        %639 = vmatpush1.msra.mxu0 %v346
        %640 = vmatprep.subr.mxu0 0.0
        %641 = vmatpush1.msra.mxu0 %v347
        %642 = vmatprep.subr.mxu0 0.0
        %643 = vmatpush1.msra.mxu0 %v348
        %644 = vmatprep.subr.mxu0 0.0
        %645 = vmatpush1.msra.mxu0 %v349
        %646 = vmatprep.subr.mxu0 0.0
        %647 = vmatpush1.msra.mxu0 %v350
        %648 = vmatprep.subr.mxu0 0.0
        %649 = vmatpush1.msra.mxu0 %v351
        %650 = vmatprep.subr.mxu0 0.0
        %651 = vmatpush1.msra.mxu0 %v352
        %652 = vmatprep.subr.mxu0 0.0
        %653 = vmatpush1.msra.mxu0 %v353
        %654 = vmatprep.subr.mxu0 0.0
        %655 = vmatpush1.msra.mxu0 0.0
        %656 = vmatprep.subr.mxu0 0.0
        %657 = vmatpush1.msra.mxu0 0.0
        %658 = vmatprep.subr.mxu0 0.0
        %659 = vmatpush1.msra.mxu0 0.0
        %660 = vmatprep.subr.mxu0 0.0
        %661 = vmatpush1.msra.mxu0 0.0
        %662 = vmatprep.subr.mxu0 0.0
        %663 = vmatpush1.msra.mxu0 0.0
        %664 = vmatprep.subr.mxu0 0.0
        %665 = vmatpush1.msra.mxu0 0.0
        %666 = vmatprep.subr.mxu0 0.0
        %667 = vmatpush1.msra.mxu0 0.0
        %668 = vmatprep.subr.mxu0 0.0
        %669 = vmatpush1.msra.mxu0 0.0
        %670 = vmatprep.subr.mxu0 0.0
        %671 = vmatpush1.msra.mxu0 0.0
        %672 = vmatprep.subr.mxu0 0.0
        %673 = vmatpush1.msra.mxu0 0.0
        %674 = vmatprep.subr.mxu0 0.0
        %675 = vmatpush1.msra.mxu0 0.0
        %676 = vmatprep.subr.mxu0 0.0
        %677 = vmatpush1.msra.mxu0 0.0
        %678 = vmatprep.subr.mxu0 0.0
        %679 = vmatpush1.msra.mxu0 0.0
        %680 = vmatprep.subr.mxu0 0.0
        %681 = vmatpush1.msra.mxu0 0.0
        %682 = vmatprep.subr.mxu0 0.0
        %683 = vmatpush1.msra.mxu0 0.0
        %684 = vmatprep.subr.mxu0 0.0
        %685 = vmatpush1.msra.mxu0 0.0
        %686 = vmatprep.mubr.f32.mxu0 0.0
        %687 = vmatmul.mubr.f32.gmra.mrb[0].mxu0 %v618
        %v688 = vpop.f32.mrb[0].mxu0
        %v689 = vadd.f32 0.0, %v688
        %v690 = vpop.f32.mrb[0].mxu0
        %691 = vdwg.mxu0
        %v692 = vadd.f32 %v621, %v689
        %v693 = vtanh.pop %v692
        %694 = vst [vmem:[%s620] sm:$0xff] %v693
        %s695 = scalar_lea.vmem [#allocation3], 24
        %v696 = vld [vmem:[%s695] sm:$0xff]
        %697 = vmatprep.subr.mxu0 0.0
        %698 = vmatpush1.msra.mxu0 %v338
        %699 = vmatprep.subr.mxu0 0.0
        %700 = vmatpush1.msra.mxu0 %v339
        %701 = vmatprep.subr.mxu0 0.0
        %702 = vmatpush1.msra.mxu0 %v340
        %703 = vmatprep.subr.mxu0 0.0
        %704 = vmatpush1.msra.mxu0 %v341
        %705 = vmatprep.subr.mxu0 0.0
        %706 = vmatpush1.msra.mxu0 %v342
        %707 = vmatprep.subr.mxu0 0.0
        %708 = vmatpush1.msra.mxu0 %v343
        %709 = vmatprep.subr.mxu0 0.0
        %710 = vmatpush1.msra.mxu0 %v344
        %711 = vmatprep.subr.mxu0 0.0
        %712 = vmatpush1.msra.mxu0 %v345
        %713 = vmatprep.subr.mxu0 0.0
        %714 = vmatpush1.msra.mxu0 %v346
        %715 = vmatprep.subr.mxu0 0.0
        %716 = vmatpush1.msra.mxu0 %v347
        %717 = vmatprep.subr.mxu0 0.0
        %718 = vmatpush1.msra.mxu0 %v348
        %719 = vmatprep.subr.mxu0 0.0
        %720 = vmatpush1.msra.mxu0 %v349
        %721 = vmatprep.subr.mxu0 0.0
        %722 = vmatpush1.msra.mxu0 %v350
        %723 = vmatprep.subr.mxu0 0.0
        %724 = vmatpush1.msra.mxu0 %v351
        %725 = vmatprep.subr.mxu0 0.0
        %726 = vmatpush1.msra.mxu0 %v352
        %727 = vmatprep.subr.mxu0 0.0
        %728 = vmatpush1.msra.mxu0 %v353
        %729 = vmatprep.subr.mxu0 0.0
        %730 = vmatpush1.msra.mxu0 0.0
        %731 = vmatprep.subr.mxu0 0.0
        %732 = vmatpush1.msra.mxu0 0.0
        %733 = vmatprep.subr.mxu0 0.0
        %734 = vmatpush1.msra.mxu0 0.0
        %735 = vmatprep.subr.mxu0 0.0
        %736 = vmatpush1.msra.mxu0 0.0
        %737 = vmatprep.subr.mxu0 0.0
        %738 = vmatpush1.msra.mxu0 0.0
        %739 = vmatprep.subr.mxu0 0.0
        %740 = vmatpush1.msra.mxu0 0.0
        %741 = vmatprep.subr.mxu0 0.0
        %742 = vmatpush1.msra.mxu0 0.0
        %743 = vmatprep.subr.mxu0 0.0
        %744 = vmatpush1.msra.mxu0 0.0
        %745 = vmatprep.subr.mxu0 0.0
        %746 = vmatpush1.msra.mxu0 0.0
        %747 = vmatprep.subr.mxu0 0.0
        %748 = vmatpush1.msra.mxu0 0.0
        %749 = vmatprep.subr.mxu0 0.0
        %750 = vmatpush1.msra.mxu0 0.0
        %751 = vmatprep.subr.mxu0 0.0
        %752 = vmatpush1.msra.mxu0 0.0
        %753 = vmatprep.subr.mxu0 0.0
        %754 = vmatpush1.msra.mxu0 0.0
        %755 = vmatprep.subr.mxu0 0.0
        %756 = vmatpush1.msra.mxu0 0.0
        %757 = vmatprep.subr.mxu0 0.0
        %758 = vmatpush1.msra.mxu0 0.0
        %759 = vmatprep.subr.mxu0 0.0
        %760 = vmatpush1.msra.mxu0 0.0
        %761 = vmatprep.mubr.f32.mxu0 0.0
        %762 = vmatmul.mubr.f32.gmra.mrb[0].mxu0 %v693
        %v763 = vpop.f32.mrb[0].mxu0
        %v764 = vadd.f32 0.0, %v763
        %v765 = vpop.f32.mrb[0].mxu0
        %766 = vdwg.mxu0
        %v767 = vadd.f32 %v696, %v764
        %v768 = vtanh.pop %v767
        %769 = vst [vmem:[%s695] sm:$0xff] %v768
        %770 = vst [vmem:[#allocation2] sm:$0xff] %v768
        %v771 = vld [vmem:[#allocation3] sm:$0xff]
        %v772 = vld [vmem:[#allocation3 + $0x8] sm:$0xff]
        %v773 = vld [vmem:[#allocation3 + $0x10] sm:$0xff]
        %v774 = vld [vmem:[#allocation3 + $0x18] sm:$0xff]
        %v775 = vld [vmem:[#allocation10] sm:$0xff]
        %v776 = vld [vmem:[#allocation10 + $0x8] sm:$0xff]
        %v777 = vld [vmem:[#allocation10 + $0x10] sm:$0xff]
        %v778 = vld [vmem:[#allocation10 + $0x18] sm:$0xff]
        %v779 = vld [vmem:[#allocation10 + $0x20] sm:$0xff]
        %v780 = vld [vmem:[#allocation10 + $0x28] sm:$0xff]
        %v781 = vld [vmem:[#allocation10 + $0x30] sm:$0xff]
        %v782 = vld [vmem:[#allocation10 + $0x38] sm:$0xff]
        %v783 = vld [vmem:[#allocation10 + $0x40] sm:$0xff]
        %v784 = vld [vmem:[#allocation10 + $0x48] sm:$0xff]
        %v785 = vld [vmem:[#allocation10 + $0x50] sm:$0xff]
        %v786 = vld [vmem:[#allocation10 + $0x58] sm:$0xff]
        %v787 = vld [vmem:[#allocation10 + $0x60] sm:$0xff]
        %v788 = vld [vmem:[#allocation10 + $0x68] sm:$0xff]
        %v789 = vld [vmem:[#allocation10 + $0x70] sm:$0xff]
        %v790 = vld [vmem:[#allocation10 + $0x78] sm:$0xff]
        %v791 = vld [vmem:[%s5] sm:$0x1]
        %v793 = vlaneseq
        %v794 = vshrl.u32 %v793, 7
        %v795 = vsub.s32 0, %v794
        %v796 = vrot.slane %v791, %v795
        %798 = vmatprep.subr.mxu0 0.0
        %799 = vmatpush1.msra.mxu0 %v775
        %800 = vmatprep.subr.mxu0 0.0
        %801 = vmatpush1.msra.mxu0 %v776
        %802 = vmatprep.subr.mxu0 0.0
        %803 = vmatpush1.msra.mxu0 %v777
        %804 = vmatprep.subr.mxu0 0.0
        %805 = vmatpush1.msra.mxu0 %v778
        %806 = vmatprep.subr.mxu0 0.0
        %807 = vmatpush1.msra.mxu0 %v779
        %808 = vmatprep.subr.mxu0 0.0
        %809 = vmatpush1.msra.mxu0 %v780
        %810 = vmatprep.subr.mxu0 0.0
        %811 = vmatpush1.msra.mxu0 %v781
        %812 = vmatprep.subr.mxu0 0.0
        %813 = vmatpush1.msra.mxu0 %v782
        %814 = vmatprep.subr.mxu0 0.0
        %815 = vmatpush1.msra.mxu0 %v783
        %816 = vmatprep.subr.mxu0 0.0
        %817 = vmatpush1.msra.mxu0 %v784
        %818 = vmatprep.subr.mxu0 0.0
        %819 = vmatpush1.msra.mxu0 %v785
        %820 = vmatprep.subr.mxu0 0.0
        %821 = vmatpush1.msra.mxu0 %v786
        %822 = vmatprep.subr.mxu0 0.0
        %823 = vmatpush1.msra.mxu0 %v787
        %824 = vmatprep.subr.mxu0 0.0
        %825 = vmatpush1.msra.mxu0 %v788
        %826 = vmatprep.subr.mxu0 0.0
        %827 = vmatpush1.msra.mxu0 %v789
        %828 = vmatprep.subr.mxu0 0.0
        %829 = vmatpush1.msra.mxu0 %v790
        %830 = vmatprep.subr.mxu0 0.0
        %831 = vmatpush1.msra.mxu0 0.0
        %832 = vmatprep.subr.mxu0 0.0
        %833 = vmatpush1.msra.mxu0 0.0
        %834 = vmatprep.subr.mxu0 0.0
        %835 = vmatpush1.msra.mxu0 0.0
        %836 = vmatprep.subr.mxu0 0.0
        %837 = vmatpush1.msra.mxu0 0.0
        %838 = vmatprep.subr.mxu0 0.0
        %839 = vmatpush1.msra.mxu0 0.0
        %840 = vmatprep.subr.mxu0 0.0
        %841 = vmatpush1.msra.mxu0 0.0
        %842 = vmatprep.subr.mxu0 0.0
        %843 = vmatpush1.msra.mxu0 0.0
        %844 = vmatprep.subr.mxu0 0.0
        %845 = vmatpush1.msra.mxu0 0.0
        %846 = vmatprep.subr.mxu0 0.0
        %847 = vmatpush1.msra.mxu0 0.0
        %848 = vmatprep.subr.mxu0 0.0
        %849 = vmatpush1.msra.mxu0 0.0
        %850 = vmatprep.subr.mxu0 0.0
        %851 = vmatpush1.msra.mxu0 0.0
        %852 = vmatprep.subr.mxu0 0.0
        %853 = vmatpush1.msra.mxu0 0.0
        %854 = vmatprep.subr.mxu0 0.0
        %855 = vmatpush1.msra.mxu0 0.0
        %856 = vmatprep.subr.mxu0 0.0
        %857 = vmatpush1.msra.mxu0 0.0
        %858 = vmatprep.subr.mxu0 0.0
        %859 = vmatpush1.msra.mxu0 0.0
        %860 = vmatprep.subr.mxu0 0.0
        %861 = vmatpush1.msra.mxu0 0.0
        %862 = vmatprep.mubr.f32.mxu0 0.0
        %863 = vmatmul.mubr.f32.gmra.mrb[0].mxu0 %v771
        %v864 = vpop.f32.mrb[0].mxu0
        %v865 = vadd.f32 %v796, %v864
        %v866 = vpop.f32.mrb[0].mxu0
        %867 = vmatprep.mubr.f32.mxu0 0.0
        %868 = vmatmul.mubr.f32.gmra.mrb[0].mxu0 %v772
        %v869 = vpop.f32.mrb[0].mxu0
        %v870 = vadd.f32 %v796, %v869
        %v871 = vpop.f32.mrb[0].mxu0
        %872 = vmatprep.mubr.f32.mxu0 0.0
        %873 = vmatmul.mubr.f32.gmra.mrb[0].mxu0 %v773
        %v874 = vpop.f32.mrb[0].mxu0
        %v875 = vadd.f32 %v796, %v874
        %v876 = vpop.f32.mrb[0].mxu0
        %877 = vmatprep.mubr.f32.mxu0 0.0
        %878 = vmatmul.mubr.f32.gmra.mrb[0].mxu0 %v774
        %v879 = vpop.f32.mrb[0].mxu0
        %v880 = vadd.f32 %v796, %v879
        %v881 = vpop.f32.mrb[0].mxu0
        %882 = vdwg.mxu0
        %883 = vst [vmem:[%s330] sm:$0xff] %v865
        %884 = vst [vmem:[%s330 + $0x8] sm:$0xff] %v870
        %885 = vst [vmem:[%s330 + $0x10] sm:$0xff] %v875
        %886 = vst [vmem:[%s330 + $0x18] sm:$0xff] %v880
        %s887 = sand.u32 %s180, 1
        %s888 = scalar_lea.sflag [#allocation6], %s887
        %s889 = sand.u32 %s180, 1
        %s890 = smul.addr %s889, 32
        %s891 = scalar_lea.vmem [#allocation12], %s890
        // Predicated region
        $region65: #{tpu_custom_call.1} parent=43 // pred_check
          %p892 = pneg %p190
        $region66: #{tpu_custom_call.1} parent=43 // pred_check_branch
          %894 = sbr.rel (%p892) target = $region68
        $region67: #{tpu_custom_call.1} parent=43 // pred_region
          %s895 = smul.u32 4, %s30
          %s897 = ssub.s32 512, 512
          %898 = vsyncadd %s888, %s897
          %s899 = sadd.s32 %s29, %s895
          %s900 = smul.addr %s899, 128
          %s901 = scalar_lea.hbm %s6, %s900
          %s902 = sshll.u32 %s891, 4
          %s903 = int_to_ptr.vmem [resolvable:$true] %s902
          %908 = dma.vmem_to_hbm [thread:$0]  %s903, 512, %s901, %s888, 128, 128, 8
        $region68: #{tpu_custom_call.1} parent=43 // pred_fallthru
          _
      $region44: #{tpu_custom_call.1} parent=5 // pred_fallthru
        _
      %p909 = scmp.le.s32.totalorder 2, %s20
      // Predicated region
      $region69: #{tpu_custom_call.1} parent=5 // pred_check
        %p910 = pneg %p909
      $region70: #{tpu_custom_call.1} parent=5 // pred_check_branch
        %912 = sbr.rel (%p910) target = $region72
      $region71: #{tpu_custom_call.1} parent=5 // pred_region
        %s913 = ssub.s32 %s20, 2
        // Predicated region
        $region73: #{tpu_custom_call.1} parent=71 // pred_check
          %p914 = pneg %p196
        $region74: #{tpu_custom_call.1} parent=71 // pred_check_branch
          %916 = sbr.rel (%p914) target = $region76
        $region75: #{tpu_custom_call.1} parent=71 // pred_region
          %s917 = sand.u32 %s181, 1
          %s918 = scalar_lea.sflag [#allocation6], %s917
          %s919 = sand.u32 %s181, 1
          %s920 = smul.addr %s919, 32
          %s921 = scalar_lea.vmem [#allocation12], %s920
          %922 = dma.done %s918, 512
        $region76: #{tpu_custom_call.1} parent=71 // pred_fallthru
          _
      $region72: #{tpu_custom_call.1} parent=5 // pred_fallthru
        _
    $region6: #{tpu_custom_call.1} parent=1 // loop_footer
      %s24 = sadd.s32 1, %s20
    $region7: #{tpu_custom_call.1} parent=1 // loop_footer_branch
      %19 = sbr.rel target = $region3
    $region8: #{tpu_custom_call.1} parent=1 // loop_exit
      _
    %923 = vsyncpa [#allocation5], 1
    %s924 = scalar_lea.sflag [#allocation5], 1
    %925 = vsyncpa %s924, 1
    %926 = vsyncpa [#allocation8], 1
    %927 = vsyncpa [#allocation11], 1
    %928 = vsyncpa [#allocation6], 1
    %s929 = scalar_lea.sflag [#allocation6], 1
    %930 = vsyncpa %s929, 1

</llo_original>
